<compile_context>
chip_gen: v7x
topology: tpu7x:2x2x1
jax: 0.10.0
libtpu: 0.0.40
codegen_flags: <defaults>
</compile_context>

<pallas_src>
import functools

import jax
import jax.numpy as jnp
from jax.experimental import pallas as pl
from jax.experimental.pallas import tpu as pltpu


_SMALL_K = 8  # layers with K <= this are lowered as VPU multiply-adds, not MXU dots


def _pinn_kernel(num_layers, t_ref, *refs):
    """Feature-major MLP forward.

    refs = (W0, b0, W1, b1, ..., W_{L-1}, b_{L-1}, out_ref)
    W_l : (out_f, in_f)   (PyTorch nn.Linear layout)
    b_l : (out_f, 1)
    t_ref / out_ref blocks: (features, batch_tile)  -> batch on the 128-lane axis.
    """
    out_ref = refs[-1]
    param_refs = refs[:-1]

    x = t_ref[...].astype(jnp.float32)  # (in_f, tm)
    tm = x.shape[1]
    for i in range(num_layers):
        w = param_refs[2 * i][...]       # (out_f, in_f)
        b = param_refs[2 * i + 1][...]   # (out_f, 1)
        out_f, in_f = w.shape
        if in_f <= _SMALL_K:
            # Tiny contraction dim (e.g. input_dim=2): a handful of broadcasted
            # multiply-adds on the VPU beats pushing a K=2 matmul through the MXU.
            y = jnp.broadcast_to(b, (out_f, tm))
            for k in range(in_f):
                y = y + w[:, k:k + 1] * x[k:k + 1, :]
        else:
            y = jnp.dot(w, x, preferred_element_type=jnp.float32) + b
        x = jnp.tanh(y) if i < num_layers - 1 else y
    out_ref[...] = x.astype(out_ref.dtype)


def pinn_forward(t, weights, biases, *, block_m=2048):
    """Run the PINN MLP forward pass with a Pallas TPU kernel.

    t:       (N, input_dim) float32
    weights: list of PyTorch-layout (out_f, in_f) float32 arrays
    biases:  list of (out_f,) float32 arrays
    Returns: (N, output_dim) float32
    """
    num_layers = len(weights)
    N, input_dim = t.shape
    output_dim = weights[-1].shape[0]

    # ---- Tile selection: big lane-dense tiles, but keep >= 2 grid steps when the
    # batch allows it (feeds both TensorCores on v7x; harmless on v5e/v6e).
    n128 = pl.cdiv(N, 128) * 128
    tm = min(block_m, n128)
    if tm == n128 and n128 >= 256:
        tm = (n128 // 2 // 128) * 128
    n_pad = pl.cdiv(N, tm) * tm
    grid = (n_pad // tm,)

    # ---- Feature-major input: (input_dim, n_pad), batch zero-padded to the tile.
    t_fm = jnp.pad(t.astype(jnp.float32).T, ((0, 0), (0, n_pad - N)))

    biases_2d = [b.reshape(-1, 1).astype(jnp.float32) for b in biases]

    in_specs = [pl.BlockSpec((input_dim, tm), lambda i: (0, i))]
    flat_params = []
    for w, b in zip(weights, biases_2d):
        in_specs.append(pl.BlockSpec(w.shape, lambda i: (0, 0)))
        in_specs.append(pl.BlockSpec(b.shape, lambda i: (0, 0)))
        flat_params.append(w.astype(jnp.float32))
        flat_params.append(b)

    out_spec = pl.BlockSpec((output_dim, tm), lambda i: (0, i))

    # ---- Advisory cost estimate for the XLA scheduler.
    flops = 2 * n_pad * sum(int(w.shape[0]) * int(w.shape[1]) for w in weights)
    transcendentals = n_pad * sum(int(w.shape[0]) for w in weights[:-1])
    bytes_accessed = 4 * (
        n_pad * (input_dim + output_dim)
        + sum(int(w.size) for w in weights)
        + sum(int(b.size) for b in biases)
    )

    kernel = functools.partial(_pinn_kernel, num_layers)

    out_fm = pl.pallas_call(
        kernel,
        out_shape=jax.ShapeDtypeStruct((output_dim, n_pad), jnp.float32),
        grid_spec=pltpu.PrefetchScalarGridSpec(
            num_scalar_prefetch=0,
            grid=grid,
            in_specs=in_specs,
            out_specs=out_spec,
        ),
        compiler_params=pltpu.CompilerParams(
            dimension_semantics=("parallel",),
        ),
        cost_estimate=pl.CostEstimate(
            flops=flops,
            transcendentals=transcendentals,
            bytes_accessed=bytes_accessed,
        ),
    )(t_fm, *flat_params)

    # Back to (N, output_dim); drop the zero-padded tail rows.
    return out_fm.T[:N]


def init_pinn_params(key, input_dim, output_dim, hidden_dim, num_layers):
    """Xavier-normal weights in PyTorch layout (out_f, in_f), zero biases."""
    dims = [input_dim] + [hidden_dim] * (num_layers - 1) + [output_dim]
    weights, biases = [], []
    for i in range(num_layers):
        key, sub = jax.random.split(key)
        fan_in, fan_out = dims[i], dims[i + 1]
        std = jnp.sqrt(2.0 / (fan_in + fan_out))
        w = std * jax.random.normal(sub, (fan_out, fan_in), dtype=jnp.float32)
        b = jnp.zeros((fan_out,), dtype=jnp.float32)
        weights.append(w)
        biases.append(b)
    return weights, biases


def pinn_forward_ref(t, weights, biases):
    """Pure-JAX reference (PyTorch semantics: x @ W.T + b, tanh between layers)."""
    x = t
    for i, (w, b) in enumerate(zip(weights, biases)):
        x = x @ w.T + b
        if i < len(weights) - 1:
            x = jnp.tanh(x)
    return x


if __name__ == "__main__":
    key = jax.random.PRNGKey(0)

    # Shapes consistent with the module: input_dim=2 (e.g. (t, x) coords),
    # output_dim=3, hidden_dim=32, num_layers=4.
    input_dim, output_dim, hidden_dim, num_layers = 2, 3, 32, 4
    weights, biases = init_pinn_params(
        key, input_dim, output_dim, hidden_dim, num_layers
    )

    # Main case: batch = 256 (2 lane-dense grid steps).
    key, k_t = jax.random.split(key)
    t = jax.random.normal(k_t, (256, input_dim), dtype=jnp.float32)
    out = jax.block_until_ready(pinn_forward(t, weights, biases))
    ref = pinn_forward_ref(t, weights, biases)
    assert out.shape == (256, output_dim)
    assert jnp.allclose(out, ref, atol=1e-5, rtol=1e-5), "mismatch vs reference (256)"

    # Ragged batch (not a multiple of 128) exercises the zero-padded tail path.
    key, k_t2 = jax.random.split(key)
    t2 = jax.random.normal(k_t2, (200, input_dim), dtype=jnp.float32)
    out2 = jax.block_until_ready(pinn_forward(t2, weights, biases))
    ref2 = pinn_forward_ref(t2, weights, biases)
    assert out2.shape == (200, output_dim)
    assert jnp.allclose(out2, ref2, atol=1e-5, rtol=1e-5), "mismatch vs reference (200)"

    print("KERNEL_OK")
</pallas_src>

<mosaic_0001>
module attributes {stable_mosaic.version = 11 : i64} {
  func.func @_pinn_kernel(%arg0: i32, %arg1: memref<2x128xf32, #tpu.memory_space<vmem>>, %arg2: memref<32x2xf32, #tpu.memory_space<vmem>>, %arg3: memref<32x1xf32, #tpu.memory_space<vmem>>, %arg4: memref<32x32xf32, #tpu.memory_space<vmem>>, %arg5: memref<32x1xf32, #tpu.memory_space<vmem>>, %arg6: memref<32x32xf32, #tpu.memory_space<vmem>>, %arg7: memref<32x1xf32, #tpu.memory_space<vmem>>, %arg8: memref<3x32xf32, #tpu.memory_space<vmem>>, %arg9: memref<3x1xf32, #tpu.memory_space<vmem>>, %arg10: memref<3x128xf32, #tpu.memory_space<vmem>>) attributes {dimension_semantics = [#tpu.dimension_semantics<parallel>], iteration_bounds = array<i64: 2>, scalar_prefetch = 0 : i64, scratch_operands = 0 : i64, tpu.core_type = #tpu.core_type<tc>, window_params = [{transform_indices = @transform_0, window_bounds = array<i64: 2, 128>}, {pipeline_mode = #tpu.pipeline_mode<synchronous>, transform_indices = @transform_1, window_bounds = array<i64: 32, 2>}, {pipeline_mode = #tpu.pipeline_mode<synchronous>, transform_indices = @transform_2, window_bounds = array<i64: 32, 1>}, {pipeline_mode = #tpu.pipeline_mode<synchronous>, transform_indices = @transform_3, window_bounds = array<i64: 32, 32>}, {pipeline_mode = #tpu.pipeline_mode<synchronous>, transform_indices = @transform_4, window_bounds = array<i64: 32, 1>}, {pipeline_mode = #tpu.pipeline_mode<synchronous>, transform_indices = @transform_5, window_bounds = array<i64: 32, 32>}, {pipeline_mode = #tpu.pipeline_mode<synchronous>, transform_indices = @transform_6, window_bounds = array<i64: 32, 1>}, {pipeline_mode = #tpu.pipeline_mode<synchronous>, transform_indices = @transform_7, window_bounds = array<i64: 3, 32>}, {pipeline_mode = #tpu.pipeline_mode<synchronous>, transform_indices = @transform_8, window_bounds = array<i64: 3, 1>}, {transform_indices = @transform_9, window_bounds = array<i64: 3, 128>}]} {
    %c0 = arith.constant 0 : index
    %c0_0 = arith.constant 0 : index
    %0 = vector.load %arg1[%c0, %c0_0] : memref<2x128xf32, #tpu.memory_space<vmem>>, vector<2x128xf32>
    %c0_1 = arith.constant 0 : index
    %c0_2 = arith.constant 0 : index
    %1 = vector.load %arg2[%c0_1, %c0_2] : memref<32x2xf32, #tpu.memory_space<vmem>>, vector<32x2xf32>
    %c0_3 = arith.constant 0 : index
    %c0_4 = arith.constant 0 : index
    %2 = vector.load %arg3[%c0_3, %c0_4] : memref<32x1xf32, #tpu.memory_space<vmem>>, vector<32x1xf32>
    %3 = vector.shape_cast %2 : vector<32x1xf32> to vector<32x1xf32>
    %4 = vector.broadcast %3 : vector<32x1xf32> to vector<32x128xf32>
    %5 = vector.extract_strided_slice %1 {offsets = [0, 0], sizes = [32, 1], strides = [1, 1]} : vector<32x2xf32> to vector<32x1xf32>
    %6 = vector.extract_strided_slice %0 {offsets = [0, 0], sizes = [1, 128], strides = [1, 1]} : vector<2x128xf32> to vector<1x128xf32>
    %7 = vector.broadcast %5 : vector<32x1xf32> to vector<32x128xf32>
    %8 = vector.broadcast %6 : vector<1x128xf32> to vector<32x128xf32>
    %9 = arith.mulf %7, %8 : vector<32x128xf32>
    %10 = arith.addf %4, %9 : vector<32x128xf32>
    %11 = vector.extract_strided_slice %1 {offsets = [0, 1], sizes = [32, 1], strides = [1, 1]} : vector<32x2xf32> to vector<32x1xf32>
    %12 = vector.extract_strided_slice %0 {offsets = [1, 0], sizes = [1, 128], strides = [1, 1]} : vector<2x128xf32> to vector<1x128xf32>
    %13 = vector.broadcast %11 : vector<32x1xf32> to vector<32x128xf32>
    %14 = vector.broadcast %12 : vector<1x128xf32> to vector<32x128xf32>
    %15 = arith.mulf %13, %14 : vector<32x128xf32>
    %16 = arith.addf %10, %15 : vector<32x128xf32>
    %17 = math.tanh %16 : vector<32x128xf32>
    %c0_5 = arith.constant 0 : index
    %c0_6 = arith.constant 0 : index
    %18 = vector.load %arg4[%c0_5, %c0_6] : memref<32x32xf32, #tpu.memory_space<vmem>>, vector<32x32xf32>
    %c0_7 = arith.constant 0 : index
    %c0_8 = arith.constant 0 : index
    %19 = vector.load %arg5[%c0_7, %c0_8] : memref<32x1xf32, #tpu.memory_space<vmem>>, vector<32x1xf32>
    %cst = arith.constant dense<0.000000e+00> : vector<32x128xf32>
    %20 = tpu.matmul %18, %17, %cst {dimension_numbers = #tpu.dot_dimension_numbers<[1], [0], [0], [1], [0, 0, 1, 1], [], []>} : vector<32x32xf32>, vector<32x128xf32>, vector<32x128xf32> -> vector<32x128xf32>
    %21 = vector.broadcast %19 : vector<32x1xf32> to vector<32x128xf32>
    %22 = arith.addf %20, %21 : vector<32x128xf32>
    %23 = math.tanh %22 : vector<32x128xf32>
    %c0_9 = arith.constant 0 : index
    %c0_10 = arith.constant 0 : index
    %24 = vector.load %arg6[%c0_9, %c0_10] : memref<32x32xf32, #tpu.memory_space<vmem>>, vector<32x32xf32>
    %c0_11 = arith.constant 0 : index
    %c0_12 = arith.constant 0 : index
    %25 = vector.load %arg7[%c0_11, %c0_12] : memref<32x1xf32, #tpu.memory_space<vmem>>, vector<32x1xf32>
    %cst_13 = arith.constant dense<0.000000e+00> : vector<32x128xf32>
    %26 = tpu.matmul %24, %23, %cst_13 {dimension_numbers = #tpu.dot_dimension_numbers<[1], [0], [0], [1], [0, 0, 1, 1], [], []>} : vector<32x32xf32>, vector<32x128xf32>, vector<32x128xf32> -> vector<32x128xf32>
    %27 = vector.broadcast %25 : vector<32x1xf32> to vector<32x128xf32>
    %28 = arith.addf %26, %27 : vector<32x128xf32>
    %29 = math.tanh %28 : vector<32x128xf32>
    %c0_14 = arith.constant 0 : index
    %c0_15 = arith.constant 0 : index
    %30 = vector.load %arg8[%c0_14, %c0_15] : memref<3x32xf32, #tpu.memory_space<vmem>>, vector<3x32xf32>
    %c0_16 = arith.constant 0 : index
    %c0_17 = arith.constant 0 : index
    %31 = vector.load %arg9[%c0_16, %c0_17] : memref<3x1xf32, #tpu.memory_space<vmem>>, vector<3x1xf32>
    %cst_18 = arith.constant dense<0.000000e+00> : vector<3x128xf32>
    %32 = tpu.matmul %30, %29, %cst_18 {dimension_numbers = #tpu.dot_dimension_numbers<[1], [0], [0], [1], [0, 0, 1, 1], [], []>} : vector<3x32xf32>, vector<32x128xf32>, vector<3x128xf32> -> vector<3x128xf32>
    %33 = vector.broadcast %31 : vector<3x1xf32> to vector<3x128xf32>
    %34 = arith.addf %32, %33 : vector<3x128xf32>
    %c0_19 = arith.constant 0 : index
    %c0_20 = arith.constant 0 : index
    %35 = vector.load %arg10[%c0_19, %c0_20] : memref<3x128xf32, #tpu.memory_space<vmem>>, vector<3x128xf32>
    tpu.vector_store %arg10[%c0_19, %c0_20], %34 {strides = array<i32>} : memref<3x128xf32, #tpu.memory_space<vmem>>, vector<3x128xf32>,
    return
  }
  func.func @transform_0(%arg0: i32) -> (i32, i32) {
    %c0_i32 = arith.constant 0 : i32
    %c0_i32_0 = arith.constant 0 : i32
    return %c0_i32, %arg0 : i32, i32
  }
  func.func @transform_1(%arg0: i32) -> (i32, i32) {
    %c0_i32 = arith.constant 0 : i32
    %c0_i32_0 = arith.constant 0 : i32
    %c0_i32_1 = arith.constant 0 : i32
    return %c0_i32, %c0_i32_0 : i32, i32
  }
  func.func @transform_2(%arg0: i32) -> (i32, i32) {
    %c0_i32 = arith.constant 0 : i32
    %c0_i32_0 = arith.constant 0 : i32
    %c0_i32_1 = arith.constant 0 : i32
    return %c0_i32, %c0_i32_0 : i32, i32
  }
  func.func @transform_3(%arg0: i32) -> (i32, i32) {
    %c0_i32 = arith.constant 0 : i32
    %c0_i32_0 = arith.constant 0 : i32
    %c0_i32_1 = arith.constant 0 : i32
    return %c0_i32, %c0_i32_0 : i32, i32
  }
  func.func @transform_4(%arg0: i32) -> (i32, i32) {
    %c0_i32 = arith.constant 0 : i32
    %c0_i32_0 = arith.constant 0 : i32
    %c0_i32_1 = arith.constant 0 : i32
    return %c0_i32, %c0_i32_0 : i32, i32
  }
  func.func @transform_5(%arg0: i32) -> (i32, i32) {
    %c0_i32 = arith.constant 0 : i32
    %c0_i32_0 = arith.constant 0 : i32
    %c0_i32_1 = arith.constant 0 : i32
    return %c0_i32, %c0_i32_0 : i32, i32
  }
  func.func @transform_6(%arg0: i32) -> (i32, i32) {
    %c0_i32 = arith.constant 0 : i32
    %c0_i32_0 = arith.constant 0 : i32
    %c0_i32_1 = arith.constant 0 : i32
    return %c0_i32, %c0_i32_0 : i32, i32
  }
  func.func @transform_7(%arg0: i32) -> (i32, i32) {
    %c0_i32 = arith.constant 0 : i32
    %c0_i32_0 = arith.constant 0 : i32
    %c0_i32_1 = arith.constant 0 : i32
    return %c0_i32, %c0_i32_0 : i32, i32
  }
  func.func @transform_8(%arg0: i32) -> (i32, i32) {
    %c0_i32 = arith.constant 0 : i32
    %c0_i32_0 = arith.constant 0 : i32
    %c0_i32_1 = arith.constant 0 : i32
    return %c0_i32, %c0_i32_0 : i32, i32
  }
  func.func @transform_9(%arg0: i32) -> (i32, i32) {
    %c0_i32 = arith.constant 0 : i32
    %c0_i32_0 = arith.constant 0 : i32
    return %c0_i32, %arg0 : i32, i32
  }
}

</mosaic_0001>

<llo_original>
// kernel: tpu_custom_call.1
$region0: #{tpu_custom_call.1}
  #allocation0 [shape = 'u32[]', space=smem, size = 0x4, offset = 0x4, fixed_abs, tag = 'smem constant byte address 0x4 - core index']
  #allocation1 [shape = 'u32[144,128]{1,0:T(1,128)}', space=vmem, size = 0x12000, scoped, tag = 'internal scratch']
  %s0 = inlined_call_operand.vmem [shape: f32[2,256], index: 0, kind: input, shape index: {}]
  %s1 = inlined_call_operand.vmem [shape: f32[32,2], index: 1, kind: input, shape index: {}]
  %s2 = inlined_call_operand.vmem [shape: f32[32,1], index: 2, kind: input, shape index: {}]
  %s3 = inlined_call_operand.vmem [shape: f32[32,32], index: 3, kind: input, shape index: {}]
  %s4 = inlined_call_operand.vmem [shape: f32[32,1], index: 4, kind: input, shape index: {}]
  %s5 = inlined_call_operand.vmem [shape: f32[32,32], index: 5, kind: input, shape index: {}]
  %s6 = inlined_call_operand.vmem [shape: f32[32,1], index: 6, kind: input, shape index: {}]
  %s7 = inlined_call_operand.vmem [shape: f32[3,32], index: 7, kind: input, shape index: {}]
  %s8 = inlined_call_operand.vmem [shape: f32[3,1], index: 8, kind: input, shape index: {}]
  %s9 = inlined_call_operand.hbm [shape: f32[3,256], index: 9, kind: output, shape index: {}]
  %s10 = sld [smem:[#allocation0]]
  $region69: #{tpu_custom_call.1} parent=0
    _
  %s12 = ssub.s32 1, %s10
  %s13 = scalar_select 0, %s12, %s10
  $region1: #{tpu_custom_call.1} parent=0
    #allocation2 [shape = 'u8[4096]{0}', space=vmem, size = 0x1000, scoped, tag = 'output window, operand 0']
    #allocation3 [shape = 's32[2]{0}', space=sflag, size = 0x8, scoped, tag = 'scoped memory for tpu_custom_call.1']
    %14 = vsyncpa [#allocation3], 0
    %s15 = scalar_lea.sflag [#allocation3], 1
    %16 = vsyncpa %s15, 0
    loop: start=0, step=1, limit=4
    $region2: #{tpu_custom_call.1} parent=1 // loop_pre_header
      _
    $region3: #{tpu_custom_call.1} parent=1 // loop_header
      %s18 = sphi 0, %s22
      %p19 = scmp.ge.s32.totalorder %s18, 4
      %s28 = sphi 0, %s30
      %s31 = sphi 0, %s28
      %s32 = sphi 0, %s31
      %s48 = sphi 0, %s32
      %s52 = sphi 0, %s52
      %s54 = sphi 0, %s52
      %s55 = sphi 0, %s54
      %s69 = sphi 0, %s55
      %s73 = sphi 0, %s73
      %s75 = sphi 0, %s73
      %s76 = sphi 0, %s75
      %s90 = sphi 0, %s76
      %s94 = sphi 0, %s94
      %s96 = sphi 0, %s94
      %s97 = sphi 0, %s96
      %s111 = sphi 0, %s97
      %s115 = sphi 0, %s115
      %s117 = sphi 0, %s115
      %s118 = sphi 0, %s117
      %s132 = sphi 0, %s118
      %s136 = sphi 0, %s136
      %s138 = sphi 0, %s136
      %s139 = sphi 0, %s138
      %s153 = sphi 0, %s139
      %s157 = sphi 0, %s157
      %s159 = sphi 0, %s157
      %s160 = sphi 0, %s159
      %s174 = sphi 0, %s160
      %s178 = sphi 0, %s178
      %s180 = sphi 0, %s178
      %s181 = sphi 0, %s180
      %s195 = sphi 0, %s181
      %s199 = sphi 0, %s199
      %s201 = sphi 0, %s199
      %s202 = sphi 0, %s201
      %s216 = sphi 0, %s202
      %s222 = sphi 0, %s224
      %s225 = sphi 0, %s222
      %s226 = sphi 0, %s225
      %s242 = sphi 0, %s226
    $region4: #{tpu_custom_call.1} parent=1 // loop_header_branch
      %21 = sbr.rel (%p19) target = $region8
    $region5: #{tpu_custom_call.1} parent=1 // loop_body
      %s23 = ssub.s32 %s18, 1
      %s24 = ssub.s32 %s18, 2
      %s25 = sadd.s32 %s18, 1
      %s26 = ssub.s32 %s18, %s25
      %p27 = scmp.eq.s32.totalorder %s26, 0
      %s29 = sadd.s32 %s28, 1
      %s30 = scalar_select %p27, %s28, %s29
      %p33 = pneg %p27
      %p34 = scmp.eq.s32.totalorder %s18, 1
      %p35 = por %p33, %p34
      %p36 = scmp.ne.s32.totalorder %s28, %s31
      %p37 = scmp.eq.s32.totalorder %s18, 0
      %p38 = por %p36, %p37
      %p39 = scmp.ne.s32.totalorder %s28, %s31
      %p40 = scmp.eq.s32.totalorder %s23, 1
      %p41 = por %p39, %p40
      %p42 = scmp.ne.s32.totalorder %s31, %s32
      %p43 = scmp.eq.s32.totalorder %s23, 0
      %p44 = por %p42, %p43
      %p45 = scmp.ne.s32.totalorder %s31, %s32
      %p46 = scmp.eq.s32.totalorder %s24, 1
      %p47 = por %p45, %p46
      %p49 = scmp.ne.s32.totalorder %s32, %s48
      %p50 = scmp.eq.s32.totalorder %s24, 0
      %p51 = por %p49, %p50
      %s53 = sadd.s32 %s52, 1
      %p56 = scmp.eq.s32.totalorder %s18, 1
      %p57 = scmp.ne.s32.totalorder %s52, %s54
      %p58 = scmp.eq.s32.totalorder %s18, 0
      %p59 = por %p57, %p58
      %p60 = scmp.ne.s32.totalorder %s52, %s54
      %p61 = scmp.eq.s32.totalorder %s23, 1
      %p62 = por %p60, %p61
      %p63 = scmp.ne.s32.totalorder %s54, %s55
      %p64 = scmp.eq.s32.totalorder %s23, 0
      %p65 = por %p63, %p64
      %p66 = scmp.ne.s32.totalorder %s54, %s55
      %p67 = scmp.eq.s32.totalorder %s24, 1
      %p68 = por %p66, %p67
      %p70 = scmp.ne.s32.totalorder %s55, %s69
      %p71 = scmp.eq.s32.totalorder %s24, 0
      %p72 = por %p70, %p71
      %s74 = sadd.s32 %s73, 1
      %p77 = scmp.eq.s32.totalorder %s18, 1
      %p78 = scmp.ne.s32.totalorder %s73, %s75
      %p79 = scmp.eq.s32.totalorder %s18, 0
      %p80 = por %p78, %p79
      %p81 = scmp.ne.s32.totalorder %s73, %s75
      %p82 = scmp.eq.s32.totalorder %s23, 1
      %p83 = por %p81, %p82
      %p84 = scmp.ne.s32.totalorder %s75, %s76
      %p85 = scmp.eq.s32.totalorder %s23, 0
      %p86 = por %p84, %p85
      %p87 = scmp.ne.s32.totalorder %s75, %s76
      %p88 = scmp.eq.s32.totalorder %s24, 1
      %p89 = por %p87, %p88
      %p91 = scmp.ne.s32.totalorder %s76, %s90
      %p92 = scmp.eq.s32.totalorder %s24, 0
      %p93 = por %p91, %p92
      %s95 = sadd.s32 %s94, 1
      %p98 = scmp.eq.s32.totalorder %s18, 1
      %p99 = scmp.ne.s32.totalorder %s94, %s96
      %p100 = scmp.eq.s32.totalorder %s18, 0
      %p101 = por %p99, %p100
      %p102 = scmp.ne.s32.totalorder %s94, %s96
      %p103 = scmp.eq.s32.totalorder %s23, 1
      %p104 = por %p102, %p103
      %p105 = scmp.ne.s32.totalorder %s96, %s97
      %p106 = scmp.eq.s32.totalorder %s23, 0
      %p107 = por %p105, %p106
      %p108 = scmp.ne.s32.totalorder %s96, %s97
      %p109 = scmp.eq.s32.totalorder %s24, 1
      %p110 = por %p108, %p109
      %p112 = scmp.ne.s32.totalorder %s97, %s111
      %p113 = scmp.eq.s32.totalorder %s24, 0
      %p114 = por %p112, %p113
      %s116 = sadd.s32 %s115, 1
      %p119 = scmp.eq.s32.totalorder %s18, 1
      %p120 = scmp.ne.s32.totalorder %s115, %s117
      %p121 = scmp.eq.s32.totalorder %s18, 0
      %p122 = por %p120, %p121
      %p123 = scmp.ne.s32.totalorder %s115, %s117
      %p124 = scmp.eq.s32.totalorder %s23, 1
      %p125 = por %p123, %p124
      %p126 = scmp.ne.s32.totalorder %s117, %s118
      %p127 = scmp.eq.s32.totalorder %s23, 0
      %p128 = por %p126, %p127
      %p129 = scmp.ne.s32.totalorder %s117, %s118
      %p130 = scmp.eq.s32.totalorder %s24, 1
      %p131 = por %p129, %p130
      %p133 = scmp.ne.s32.totalorder %s118, %s132
      %p134 = scmp.eq.s32.totalorder %s24, 0
      %p135 = por %p133, %p134
      %s137 = sadd.s32 %s136, 1
      %p140 = scmp.eq.s32.totalorder %s18, 1
      %p141 = scmp.ne.s32.totalorder %s136, %s138
      %p142 = scmp.eq.s32.totalorder %s18, 0
      %p143 = por %p141, %p142
      %p144 = scmp.ne.s32.totalorder %s136, %s138
      %p145 = scmp.eq.s32.totalorder %s23, 1
      %p146 = por %p144, %p145
      %p147 = scmp.ne.s32.totalorder %s138, %s139
      %p148 = scmp.eq.s32.totalorder %s23, 0
      %p149 = por %p147, %p148
      %p150 = scmp.ne.s32.totalorder %s138, %s139
      %p151 = scmp.eq.s32.totalorder %s24, 1
      %p152 = por %p150, %p151
      %p154 = scmp.ne.s32.totalorder %s139, %s153
      %p155 = scmp.eq.s32.totalorder %s24, 0
      %p156 = por %p154, %p155
      %s158 = sadd.s32 %s157, 1
      %p161 = scmp.eq.s32.totalorder %s18, 1
      %p162 = scmp.ne.s32.totalorder %s157, %s159
      %p163 = scmp.eq.s32.totalorder %s18, 0
      %p164 = por %p162, %p163
      %p165 = scmp.ne.s32.totalorder %s157, %s159
      %p166 = scmp.eq.s32.totalorder %s23, 1
      %p167 = por %p165, %p166
      %p168 = scmp.ne.s32.totalorder %s159, %s160
      %p169 = scmp.eq.s32.totalorder %s23, 0
      %p170 = por %p168, %p169
      %p171 = scmp.ne.s32.totalorder %s159, %s160
      %p172 = scmp.eq.s32.totalorder %s24, 1
      %p173 = por %p171, %p172
      %p175 = scmp.ne.s32.totalorder %s160, %s174
      %p176 = scmp.eq.s32.totalorder %s24, 0
      %p177 = por %p175, %p176
      %s179 = sadd.s32 %s178, 1
      %p182 = scmp.eq.s32.totalorder %s18, 1
      %p183 = scmp.ne.s32.totalorder %s178, %s180
      %p184 = scmp.eq.s32.totalorder %s18, 0
      %p185 = por %p183, %p184
      %p186 = scmp.ne.s32.totalorder %s178, %s180
      %p187 = scmp.eq.s32.totalorder %s23, 1
      %p188 = por %p186, %p187
      %p189 = scmp.ne.s32.totalorder %s180, %s181
      %p190 = scmp.eq.s32.totalorder %s23, 0
      %p191 = por %p189, %p190
      %p192 = scmp.ne.s32.totalorder %s180, %s181
      %p193 = scmp.eq.s32.totalorder %s24, 1
      %p194 = por %p192, %p193
      %p196 = scmp.ne.s32.totalorder %s181, %s195
      %p197 = scmp.eq.s32.totalorder %s24, 0
      %p198 = por %p196, %p197
      %s200 = sadd.s32 %s199, 1
      %p203 = scmp.eq.s32.totalorder %s18, 1
      %p204 = scmp.ne.s32.totalorder %s199, %s201
      %p205 = scmp.eq.s32.totalorder %s18, 0
      %p206 = por %p204, %p205
      %p207 = scmp.ne.s32.totalorder %s199, %s201
      %p208 = scmp.eq.s32.totalorder %s23, 1
      %p209 = por %p207, %p208
      %p210 = scmp.ne.s32.totalorder %s201, %s202
      %p211 = scmp.eq.s32.totalorder %s23, 0
      %p212 = por %p210, %p211
      %p213 = scmp.ne.s32.totalorder %s201, %s202
      %p214 = scmp.eq.s32.totalorder %s24, 1
      %p215 = por %p213, %p214
      %p217 = scmp.ne.s32.totalorder %s202, %s216
      %p218 = scmp.eq.s32.totalorder %s24, 0
      %p219 = por %p217, %p218
      %s220 = ssub.s32 %s18, %s25
      %p221 = scmp.eq.s32.totalorder %s220, 0
      %s223 = sadd.s32 %s222, 1
      %s224 = scalar_select %p221, %s222, %s223
      %p227 = pneg %p221
      %p228 = scmp.eq.s32.totalorder %s18, 1
      %p229 = por %p227, %p228
      %p230 = scmp.ne.s32.totalorder %s222, %s225
      %p231 = scmp.eq.s32.totalorder %s18, 0
      %p232 = por %p230, %p231
      %p233 = scmp.ne.s32.totalorder %s222, %s225
      %p234 = scmp.eq.s32.totalorder %s23, 1
      %p235 = por %p233, %p234
      %p236 = scmp.ne.s32.totalorder %s225, %s226
      %p237 = scmp.eq.s32.totalorder %s23, 0
      %p238 = por %p236, %p237
      %p239 = scmp.ne.s32.totalorder %s225, %s226
      %p240 = scmp.eq.s32.totalorder %s24, 1
      %p241 = por %p239, %p240
      %p243 = scmp.ne.s32.totalorder %s226, %s242
      %p244 = scmp.eq.s32.totalorder %s24, 0
      %p245 = por %p243, %p244
      %p246 = scmp.le.s32.totalorder 1, %s18
      %p247 = scmp.lt.s32.totalorder %s18, 3
      %p248 = pnand %p246, %p247
      %p249 = pneg %p248
      // Predicated region
      $region9: #{tpu_custom_call.1} parent=5 // pred_check
        _
      $region10: #{tpu_custom_call.1} parent=5 // pred_check_branch
        %251 = sbr.rel (%p248) target = $region12
      $region11: #{tpu_custom_call.1} parent=5 // pred_region
        %s252 = ssub.s32 %s18, 1
        // Predicated region
        $region13: #{tpu_custom_call.1} parent=11 // pred_check
          %p253 = pneg %p65
        $region14: #{tpu_custom_call.1} parent=11 // pred_check_branch
          %255 = sbr.rel (%p253) target = $region16
        $region15: #{tpu_custom_call.1} parent=11 // pred_region
          _
        $region16: #{tpu_custom_call.1} parent=11 // pred_fallthru
          _
        // Predicated region
        $region17: #{tpu_custom_call.1} parent=11 // pred_check
          %p256 = pneg %p86
        $region18: #{tpu_custom_call.1} parent=11 // pred_check_branch
          %258 = sbr.rel (%p256) target = $region20
        $region19: #{tpu_custom_call.1} parent=11 // pred_region
          _
        $region20: #{tpu_custom_call.1} parent=11 // pred_fallthru
          _
        // Predicated region
        $region21: #{tpu_custom_call.1} parent=11 // pred_check
          %p259 = pneg %p107
        $region22: #{tpu_custom_call.1} parent=11 // pred_check_branch
          %261 = sbr.rel (%p259) target = $region24
        $region23: #{tpu_custom_call.1} parent=11 // pred_region
          _
        $region24: #{tpu_custom_call.1} parent=11 // pred_fallthru
          _
        // Predicated region
        $region25: #{tpu_custom_call.1} parent=11 // pred_check
          %p262 = pneg %p128
        $region26: #{tpu_custom_call.1} parent=11 // pred_check_branch
          %264 = sbr.rel (%p262) target = $region28
        $region27: #{tpu_custom_call.1} parent=11 // pred_region
          _
        $region28: #{tpu_custom_call.1} parent=11 // pred_fallthru
          _
        // Predicated region
        $region29: #{tpu_custom_call.1} parent=11 // pred_check
          %p265 = pneg %p149
        $region30: #{tpu_custom_call.1} parent=11 // pred_check_branch
          %267 = sbr.rel (%p265) target = $region32
        $region31: #{tpu_custom_call.1} parent=11 // pred_region
          _
        $region32: #{tpu_custom_call.1} parent=11 // pred_fallthru
          _
        // Predicated region
        $region33: #{tpu_custom_call.1} parent=11 // pred_check
          %p268 = pneg %p170
        $region34: #{tpu_custom_call.1} parent=11 // pred_check_branch
          %270 = sbr.rel (%p268) target = $region36
        $region35: #{tpu_custom_call.1} parent=11 // pred_region
          _
        $region36: #{tpu_custom_call.1} parent=11 // pred_fallthru
          _
        // Predicated region
        $region37: #{tpu_custom_call.1} parent=11 // pred_check
          %p271 = pneg %p191
        $region38: #{tpu_custom_call.1} parent=11 // pred_check_branch
          %273 = sbr.rel (%p271) target = $region40
        $region39: #{tpu_custom_call.1} parent=11 // pred_region
          _
        $region40: #{tpu_custom_call.1} parent=11 // pred_fallthru
          _
        // Predicated region
        $region41: #{tpu_custom_call.1} parent=11 // pred_check
          %p274 = pneg %p212
        $region42: #{tpu_custom_call.1} parent=11 // pred_check_branch
          %276 = sbr.rel (%p274) target = $region44
        $region43: #{tpu_custom_call.1} parent=11 // pred_region
          _
        $region44: #{tpu_custom_call.1} parent=11 // pred_fallthru
          _
      $region12: #{tpu_custom_call.1} parent=5 // pred_fallthru
        _
      %p277 = scmp.lt.s32.totalorder %s18, 2
      // Predicated region
      $region45: #{tpu_custom_call.1} parent=5 // pred_check
        %p278 = pneg %p277
      $region46: #{tpu_custom_call.1} parent=5 // pred_check_branch
        %280 = sbr.rel (%p278) target = $region48
      $region47: #{tpu_custom_call.1} parent=5 // pred_region
        // Predicated region
        $region49: #{tpu_custom_call.1} parent=47 // pred_check
          %p281 = pneg %p38
        $region50: #{tpu_custom_call.1} parent=47 // pred_check_branch
          %283 = sbr.rel (%p281) target = $region52
        $region51: #{tpu_custom_call.1} parent=47 // pred_region
          %p284 = scmp.lt.s32.totalorder %s18, 1
          %s285 = scalar_select %p284, %s18, 1
          %s286 = smul.addr %s285, 2
          %s287 = scalar_lea.vmem %s0, %s286
        $region52: #{tpu_custom_call.1} parent=47 // pred_fallthru
          _
      $region48: #{tpu_custom_call.1} parent=5 // pred_fallthru
        _
      %p288 = scmp.le.s32.totalorder 1, %s18
      %p289 = scmp.lt.s32.totalorder %s18, 3
      %p290 = pnand %p288, %p289
      %p291 = pneg %p290
      // Predicated region
      $region53: #{tpu_custom_call.1} parent=5 // pred_check
        _
      $region54: #{tpu_custom_call.1} parent=5 // pred_check_branch
        %293 = sbr.rel (%p290) target = $region56
      $region55: #{tpu_custom_call.1} parent=5 // pred_region
        %s294 = ssub.s32 %s18, 1
        %p295 = scmp.lt.s32.totalorder %s23, 1
        %s296 = scalar_select %p295, %s23, 1
        %s297 = smul.addr %s296, 2
        %s298 = scalar_lea.vmem %s0, %s297
        %p299 = pneg %p44
        %p300 = pneg %p41
        %p301 = pneg %p65
        %p302 = pneg %p62
        %p303 = pneg %p86
        %p304 = pneg %p83
        %p305 = pneg %p107
        %p306 = pneg %p104
        %p307 = pneg %p128
        %p308 = pneg %p125
        %p309 = pneg %p149
        %p310 = pneg %p146
        %p311 = pneg %p170
        %p312 = pneg %p167
        %p313 = pneg %p191
        %p314 = pneg %p188
        %p315 = pneg %p212
        %p316 = pneg %p209
        %p317 = pneg %p238
        %p318 = pneg %p235
        %s319 = sand.u32 %s225, 1
        %s320 = scalar_lea.sflag [#allocation3], %s319
        %s321 = sand.u32 %s225, 1
        %s322 = smul.addr %s321, 4
        %s323 = scalar_lea.vmem [#allocation2], %s322
        %p324 = scmp.lt.s32.totalorder %s23, 1
        %s325 = scalar_select %p324, %s23, 1
        %s326 = smul.addr %s325, 2
        %s327 = scalar_lea.vmem %s0, %s326
        %v328 = vld [vmem:[%s327] sm:$0x3]
        %v329 = vld [vmem:[%s1] sm:$0xff]
        %v330 = vld [vmem:[%s1 + $0x8] sm:$0xff]
        %v331 = vld [vmem:[%s1 + $0x10] sm:$0xff]
        %v332 = vld [vmem:[%s1 + $0x18] sm:$0xff]
        %v333 = vld [vmem:[%s2] sm:$0xff]
        %v334 = vld [vmem:[%s2 + $0x8] sm:$0xff]
        %v335 = vld [vmem:[%s2 + $0x10] sm:$0xff]
        %v336 = vld [vmem:[%s2 + $0x18] sm:$0xff]
        %338 = vset.pattern.permute.xlu0 0
        %339 = vperm.xlu0 %338, %v333
        %v340 = vpop.permute.xlu0 %339
        %343 = vset.pattern.permute.xlu0 0
        %344 = vperm.xlu0 %343, %v334
        %v345 = vpop.permute.xlu0 %344
        %348 = vset.pattern.permute.xlu0 0
        %349 = vperm.xlu0 %348, %v335
        %v350 = vpop.permute.xlu0 %349
        %353 = vset.pattern.permute.xlu0 0
        %354 = vperm.xlu0 %353, %v336
        %v355 = vpop.permute.xlu0 %354
        %358 = vset.pattern.permute.xlu0 0
        %359 = vperm.xlu0 %358, %v329
        %v360 = vpop.permute.xlu0 %359
        %363 = vset.pattern.permute.xlu0 0
        %364 = vperm.xlu0 %363, %v330
        %v365 = vpop.permute.xlu0 %364
        %368 = vset.pattern.permute.xlu0 0
        %369 = vperm.xlu0 %368, %v331
        %v370 = vpop.permute.xlu0 %369
        %373 = vset.pattern.permute.xlu0 0
        %374 = vperm.xlu0 %373, %v332
        %v375 = vpop.permute.xlu0 %374
        %v377 = vlaneseq
        %v378 = vshrl.u32 %v377, 7
        %v379 = vsub.s32 0, %v378
        %v380 = vrot.slane %v328, %v379
        %v381 = vmul.f32 %v360, %v380
        %v382 = vmul.f32 %v365, %v380
        %v383 = vmul.f32 %v370, %v380
        %v384 = vmul.f32 %v375, %v380
        %v385 = vadd.f32 %v340, %v381
        %v386 = vadd.f32 %v345, %v382
        %v387 = vadd.f32 %v350, %v383
        %v388 = vadd.f32 %v355, %v384
        %389 = vset.pattern.permute.xlu0 1
        %390 = vperm.xlu0 %389, %v329
        %v391 = vpop.permute.xlu0 %390
        %393 = vset.pattern.permute.xlu0 1
        %394 = vperm.xlu0 %393, %v330
        %v395 = vpop.permute.xlu0 %394
        %397 = vset.pattern.permute.xlu0 1
        %398 = vperm.xlu0 %397, %v331
        %v399 = vpop.permute.xlu0 %398
        %401 = vset.pattern.permute.xlu0 1
        %402 = vperm.xlu0 %401, %v332
        %v403 = vpop.permute.xlu0 %402
        %v405 = vlaneseq
        %v406 = vshrl.u32 %v405, 7
        %v407 = vsub.s32 1, %v406
        %v408 = vrot.slane %v328, %v407
        %v409 = vmul.f32 %v391, %v408
        %v410 = vmul.f32 %v395, %v408
        %v411 = vmul.f32 %v399, %v408
        %v412 = vmul.f32 %v403, %v408
        %v413 = vadd.f32 %v385, %v409
        %v414 = vadd.f32 %v386, %v410
        %v415 = vadd.f32 %v387, %v411
        %v416 = vadd.f32 %v388, %v412
        %v417 = vtanh.pop %v413
        %v418 = vtanh.pop %v414
        %v419 = vtanh.pop %v415
        %v420 = vtanh.pop %v416
        %v421 = vld [vmem:[%s3] sm:$0xff]
        %v422 = vld [vmem:[%s3 + $0x8] sm:$0xff]
        %v423 = vld [vmem:[%s3 + $0x10] sm:$0xff]
        %v424 = vld [vmem:[%s3 + $0x18] sm:$0xff]
        %v425 = vld [vmem:[%s4] sm:$0xff]
        %v426 = vld [vmem:[%s4 + $0x8] sm:$0xff]
        %v427 = vld [vmem:[%s4 + $0x10] sm:$0xff]
        %v428 = vld [vmem:[%s4 + $0x18] sm:$0xff]
        %430 = vset.pattern.permute.xlu0 0
        %431 = vperm.xlu0 %430, %v425
        %v432 = vpop.permute.xlu0 %431
        %435 = vset.pattern.permute.xlu0 0
        %436 = vperm.xlu0 %435, %v426
        %v437 = vpop.permute.xlu0 %436
        %440 = vset.pattern.permute.xlu0 0
        %441 = vperm.xlu0 %440, %v427
        %v442 = vpop.permute.xlu0 %441
        %445 = vset.pattern.permute.xlu0 0
        %446 = vperm.xlu0 %445, %v428
        %v447 = vpop.permute.xlu0 %446
        %vm449 = vcmask 261120
        %v451 = vsel %vm449, %v421, 0
        %v454 = vsel %vm449, %v422, 0
        %v457 = vsel %vm449, %v423, 0
        %v460 = vsel %vm449, %v424, 0
        %462 = vmatprep.subr.mxu0 0.0
        %463 = vmatpush1.msra.mxu0 %v417
        %464 = vmatprep.subr.mxu0 0.0
        %465 = vmatpush1.msra.mxu0 %v418
        %466 = vmatprep.subr.mxu0 0.0
        %467 = vmatpush1.msra.mxu0 %v419
        %468 = vmatprep.subr.mxu0 0.0
        %469 = vmatpush1.msra.mxu0 %v420
        %470 = vmatprep.subr.mxu0 0.0
        %471 = vmatpush1.msra.mxu0 0.0
        %472 = vmatprep.subr.mxu0 0.0
        %473 = vmatpush1.msra.mxu0 0.0
        %474 = vmatprep.subr.mxu0 0.0
        %475 = vmatpush1.msra.mxu0 0.0
        %476 = vmatprep.subr.mxu0 0.0
        %477 = vmatpush1.msra.mxu0 0.0
        %478 = vmatprep.subr.mxu0 0.0
        %479 = vmatpush1.msra.mxu0 0.0
        %480 = vmatprep.subr.mxu0 0.0
        %481 = vmatpush1.msra.mxu0 0.0
        %482 = vmatprep.subr.mxu0 0.0
        %483 = vmatpush1.msra.mxu0 0.0
        %484 = vmatprep.subr.mxu0 0.0
        %485 = vmatpush1.msra.mxu0 0.0
        %486 = vmatprep.subr.mxu0 0.0
        %487 = vmatpush1.msra.mxu0 0.0
        %488 = vmatprep.subr.mxu0 0.0
        %489 = vmatpush1.msra.mxu0 0.0
        %490 = vmatprep.subr.mxu0 0.0
        %491 = vmatpush1.msra.mxu0 0.0
        %492 = vmatprep.subr.mxu0 0.0
        %493 = vmatpush1.msra.mxu0 0.0
        %494 = vmatprep.subr.mxu0 0.0
        %495 = vmatpush1.msra.mxu0 0.0
        %496 = vmatprep.subr.mxu0 0.0
        %497 = vmatpush1.msra.mxu0 0.0
        %498 = vmatprep.subr.mxu0 0.0
        %499 = vmatpush1.msra.mxu0 0.0
        %500 = vmatprep.subr.mxu0 0.0
        %501 = vmatpush1.msra.mxu0 0.0
        %502 = vmatprep.subr.mxu0 0.0
        %503 = vmatpush1.msra.mxu0 0.0
        %504 = vmatprep.subr.mxu0 0.0
        %505 = vmatpush1.msra.mxu0 0.0
        %506 = vmatprep.subr.mxu0 0.0
        %507 = vmatpush1.msra.mxu0 0.0
        %508 = vmatprep.subr.mxu0 0.0
        %509 = vmatpush1.msra.mxu0 0.0
        %510 = vmatprep.subr.mxu0 0.0
        %511 = vmatpush1.msra.mxu0 0.0
        %512 = vmatprep.subr.mxu0 0.0
        %513 = vmatpush1.msra.mxu0 0.0
        %514 = vmatprep.subr.mxu0 0.0
        %515 = vmatpush1.msra.mxu0 0.0
        %516 = vmatprep.subr.mxu0 0.0
        %517 = vmatpush1.msra.mxu0 0.0
        %518 = vmatprep.subr.mxu0 0.0
        %519 = vmatpush1.msra.mxu0 0.0
        %520 = vmatprep.subr.mxu0 0.0
        %521 = vmatpush1.msra.mxu0 0.0
        %522 = vmatprep.subr.mxu0 0.0
        %523 = vmatpush1.msra.mxu0 0.0
        %524 = vmatprep.subr.mxu0 0.0
        %525 = vmatpush1.msra.mxu0 0.0
        %526 = vmatprep.mubr.f32.mxu0 0.0
        %527 = vmatmul.mubr.f32.gmra.mrb[0].mxu0 %v451
        %v528 = vpop.f32.mrb[0].mxu0
        %v529 = vadd.f32 %v432, %v528
        %v530 = vpop.f32.mrb[0].mxu0
        %531 = vmatprep.mubr.f32.mxu0 0.0
        %532 = vmatmul.mubr.f32.gmra.mrb[0].mxu0 %v454
        %v533 = vpop.f32.mrb[0].mxu0
        %v534 = vadd.f32 %v437, %v533
        %v535 = vpop.f32.mrb[0].mxu0
        %536 = vmatprep.mubr.f32.mxu0 0.0
        %537 = vmatmul.mubr.f32.gmra.mrb[0].mxu0 %v457
        %v538 = vpop.f32.mrb[0].mxu0
        %v539 = vadd.f32 %v442, %v538
        %v540 = vpop.f32.mrb[0].mxu0
        %541 = vmatprep.mubr.f32.mxu0 0.0
        %542 = vmatmul.mubr.f32.gmra.mrb[0].mxu0 %v460
        %v543 = vpop.f32.mrb[0].mxu0
        %v544 = vadd.f32 %v447, %v543
        %v545 = vpop.f32.mrb[0].mxu0
        %546 = vdwg.mxu0
        %v547 = vtanh.pop %v529
        %v548 = vtanh.pop %v534
        %v549 = vtanh.pop %v539
        %v550 = vtanh.pop %v544
        %v551 = vld [vmem:[%s5] sm:$0xff]
        %v552 = vld [vmem:[%s5 + $0x8] sm:$0xff]
        %v553 = vld [vmem:[%s5 + $0x10] sm:$0xff]
        %v554 = vld [vmem:[%s5 + $0x18] sm:$0xff]
        %v555 = vld [vmem:[%s6] sm:$0xff]
        %v556 = vld [vmem:[%s6 + $0x8] sm:$0xff]
        %v557 = vld [vmem:[%s6 + $0x10] sm:$0xff]
        %v558 = vld [vmem:[%s6 + $0x18] sm:$0xff]
        %560 = vset.pattern.permute.xlu0 0
        %561 = vperm.xlu0 %560, %v555
        %v562 = vpop.permute.xlu0 %561
        %565 = vset.pattern.permute.xlu0 0
        %566 = vperm.xlu0 %565, %v556
        %v567 = vpop.permute.xlu0 %566
        %570 = vset.pattern.permute.xlu0 0
        %571 = vperm.xlu0 %570, %v557
        %v572 = vpop.permute.xlu0 %571
        %575 = vset.pattern.permute.xlu0 0
        %576 = vperm.xlu0 %575, %v558
        %v577 = vpop.permute.xlu0 %576
        %v580 = vsel %vm449, %v551, 0
        %v583 = vsel %vm449, %v552, 0
        %v586 = vsel %vm449, %v553, 0
        %v589 = vsel %vm449, %v554, 0
        %591 = vmatprep.subr.mxu0 0.0
        %592 = vmatpush1.msra.mxu0 %v547
        %593 = vmatprep.subr.mxu0 0.0
        %594 = vmatpush1.msra.mxu0 %v548
        %595 = vmatprep.subr.mxu0 0.0
        %596 = vmatpush1.msra.mxu0 %v549
        %597 = vmatprep.subr.mxu0 0.0
        %598 = vmatpush1.msra.mxu0 %v550
        %599 = vmatprep.subr.mxu0 0.0
        %600 = vmatpush1.msra.mxu0 0.0
        %601 = vmatprep.subr.mxu0 0.0
        %602 = vmatpush1.msra.mxu0 0.0
        %603 = vmatprep.subr.mxu0 0.0
        %604 = vmatpush1.msra.mxu0 0.0
        %605 = vmatprep.subr.mxu0 0.0
        %606 = vmatpush1.msra.mxu0 0.0
        %607 = vmatprep.subr.mxu0 0.0
        %608 = vmatpush1.msra.mxu0 0.0
        %609 = vmatprep.subr.mxu0 0.0
        %610 = vmatpush1.msra.mxu0 0.0
        %611 = vmatprep.subr.mxu0 0.0
        %612 = vmatpush1.msra.mxu0 0.0
        %613 = vmatprep.subr.mxu0 0.0
        %614 = vmatpush1.msra.mxu0 0.0
        %615 = vmatprep.subr.mxu0 0.0
        %616 = vmatpush1.msra.mxu0 0.0
        %617 = vmatprep.subr.mxu0 0.0
        %618 = vmatpush1.msra.mxu0 0.0
        %619 = vmatprep.subr.mxu0 0.0
        %620 = vmatpush1.msra.mxu0 0.0
        %621 = vmatprep.subr.mxu0 0.0
        %622 = vmatpush1.msra.mxu0 0.0
        %623 = vmatprep.subr.mxu0 0.0
        %624 = vmatpush1.msra.mxu0 0.0
        %625 = vmatprep.subr.mxu0 0.0
        %626 = vmatpush1.msra.mxu0 0.0
        %627 = vmatprep.subr.mxu0 0.0
        %628 = vmatpush1.msra.mxu0 0.0
        %629 = vmatprep.subr.mxu0 0.0
        %630 = vmatpush1.msra.mxu0 0.0
        %631 = vmatprep.subr.mxu0 0.0
        %632 = vmatpush1.msra.mxu0 0.0
        %633 = vmatprep.subr.mxu0 0.0
        %634 = vmatpush1.msra.mxu0 0.0
        %635 = vmatprep.subr.mxu0 0.0
        %636 = vmatpush1.msra.mxu0 0.0
        %637 = vmatprep.subr.mxu0 0.0
        %638 = vmatpush1.msra.mxu0 0.0
        %639 = vmatprep.subr.mxu0 0.0
        %640 = vmatpush1.msra.mxu0 0.0
        %641 = vmatprep.subr.mxu0 0.0
        %642 = vmatpush1.msra.mxu0 0.0
        %643 = vmatprep.subr.mxu0 0.0
        %644 = vmatpush1.msra.mxu0 0.0
        %645 = vmatprep.subr.mxu0 0.0
        %646 = vmatpush1.msra.mxu0 0.0
        %647 = vmatprep.subr.mxu0 0.0
        %648 = vmatpush1.msra.mxu0 0.0
        %649 = vmatprep.subr.mxu0 0.0
        %650 = vmatpush1.msra.mxu0 0.0
        %651 = vmatprep.subr.mxu0 0.0
        %652 = vmatpush1.msra.mxu0 0.0
        %653 = vmatprep.subr.mxu0 0.0
        %654 = vmatpush1.msra.mxu0 0.0
        %655 = vmatprep.mubr.f32.mxu0 0.0
        %656 = vmatmul.mubr.f32.gmra.mrb[0].mxu0 %v580
        %v657 = vpop.f32.mrb[0].mxu0
        %v658 = vadd.f32 %v562, %v657
        %v659 = vpop.f32.mrb[0].mxu0
        %660 = vmatprep.mubr.f32.mxu0 0.0
        %661 = vmatmul.mubr.f32.gmra.mrb[0].mxu0 %v583
        %v662 = vpop.f32.mrb[0].mxu0
        %v663 = vadd.f32 %v567, %v662
        %v664 = vpop.f32.mrb[0].mxu0
        %665 = vmatprep.mubr.f32.mxu0 0.0
        %666 = vmatmul.mubr.f32.gmra.mrb[0].mxu0 %v586
        %v667 = vpop.f32.mrb[0].mxu0
        %v668 = vadd.f32 %v572, %v667
        %v669 = vpop.f32.mrb[0].mxu0
        %670 = vmatprep.mubr.f32.mxu0 0.0
        %671 = vmatmul.mubr.f32.gmra.mrb[0].mxu0 %v589
        %v672 = vpop.f32.mrb[0].mxu0
        %v673 = vadd.f32 %v577, %v672
        %v674 = vpop.f32.mrb[0].mxu0
        %675 = vdwg.mxu0
        %v676 = vtanh.pop %v658
        %v677 = vtanh.pop %v663
        %v678 = vtanh.pop %v668
        %v679 = vtanh.pop %v673
        %v680 = vld [vmem:[%s7] sm:$0x7]
        %v681 = vld [vmem:[%s8] sm:$0x7]
        %683 = vset.pattern.permute.xlu0 0
        %684 = vperm.xlu0 %683, %v681
        %v685 = vpop.permute.xlu0 %684
        %v688 = vsel %vm449, %v680, 0
        %690 = vmatprep.subr.mxu0 0.0
        %691 = vmatpush1.msra.mxu0 %v676
        %692 = vmatprep.subr.mxu0 0.0
        %693 = vmatpush1.msra.mxu0 %v677
        %694 = vmatprep.subr.mxu0 0.0
        %695 = vmatpush1.msra.mxu0 %v678
        %696 = vmatprep.subr.mxu0 0.0
        %697 = vmatpush1.msra.mxu0 %v679
        %698 = vmatprep.subr.mxu0 0.0
        %699 = vmatpush1.msra.mxu0 0.0
        %700 = vmatprep.subr.mxu0 0.0
        %701 = vmatpush1.msra.mxu0 0.0
        %702 = vmatprep.subr.mxu0 0.0
        %703 = vmatpush1.msra.mxu0 0.0
        %704 = vmatprep.subr.mxu0 0.0
        %705 = vmatpush1.msra.mxu0 0.0
        %706 = vmatprep.subr.mxu0 0.0
        %707 = vmatpush1.msra.mxu0 0.0
        %708 = vmatprep.subr.mxu0 0.0
        %709 = vmatpush1.msra.mxu0 0.0
        %710 = vmatprep.subr.mxu0 0.0
        %711 = vmatpush1.msra.mxu0 0.0
        %712 = vmatprep.subr.mxu0 0.0
        %713 = vmatpush1.msra.mxu0 0.0
        %714 = vmatprep.subr.mxu0 0.0
        %715 = vmatpush1.msra.mxu0 0.0
        %716 = vmatprep.subr.mxu0 0.0
        %717 = vmatpush1.msra.mxu0 0.0
        %718 = vmatprep.subr.mxu0 0.0
        %719 = vmatpush1.msra.mxu0 0.0
        %720 = vmatprep.subr.mxu0 0.0
        %721 = vmatpush1.msra.mxu0 0.0
        %722 = vmatprep.subr.mxu0 0.0
        %723 = vmatpush1.msra.mxu0 0.0
        %724 = vmatprep.subr.mxu0 0.0
        %725 = vmatpush1.msra.mxu0 0.0
        %726 = vmatprep.subr.mxu0 0.0
        %727 = vmatpush1.msra.mxu0 0.0
        %728 = vmatprep.subr.mxu0 0.0
        %729 = vmatpush1.msra.mxu0 0.0
        %730 = vmatprep.subr.mxu0 0.0
        %731 = vmatpush1.msra.mxu0 0.0
        %732 = vmatprep.subr.mxu0 0.0
        %733 = vmatpush1.msra.mxu0 0.0
        %734 = vmatprep.subr.mxu0 0.0
        %735 = vmatpush1.msra.mxu0 0.0
        %736 = vmatprep.subr.mxu0 0.0
        %737 = vmatpush1.msra.mxu0 0.0
        %738 = vmatprep.subr.mxu0 0.0
        %739 = vmatpush1.msra.mxu0 0.0
        %740 = vmatprep.subr.mxu0 0.0
        %741 = vmatpush1.msra.mxu0 0.0
        %742 = vmatprep.subr.mxu0 0.0
        %743 = vmatpush1.msra.mxu0 0.0
        %744 = vmatprep.subr.mxu0 0.0
        %745 = vmatpush1.msra.mxu0 0.0
        %746 = vmatprep.subr.mxu0 0.0
        %747 = vmatpush1.msra.mxu0 0.0
        %748 = vmatprep.subr.mxu0 0.0
        %749 = vmatpush1.msra.mxu0 0.0
        %750 = vmatprep.subr.mxu0 0.0
        %751 = vmatpush1.msra.mxu0 0.0
        %752 = vmatprep.subr.mxu0 0.0
        %753 = vmatpush1.msra.mxu0 0.0
        %754 = vmatprep.mubr.f32.mxu0 0.0
        %755 = vmatmul.mubr.f32.gmra.mrb[0].mxu0 %v688
        %v756 = vpop.f32.mrb[0].mxu0
        %v757 = vadd.f32 %v685, %v756
        %v758 = vpop.f32.mrb[0].mxu0
        %759 = vdwg.mxu0
        %760 = vst [vmem:[%s323] sm:$0x7] %v757
        %s761 = sand.u32 %s225, 1
        %s762 = scalar_lea.sflag [#allocation3], %s761
        %s763 = sand.u32 %s225, 1
        %s764 = smul.addr %s763, 4
        %s765 = scalar_lea.vmem [#allocation2], %s764
        // Predicated region
        $region57: #{tpu_custom_call.1} parent=55 // pred_check
          %p766 = pneg %p235
        $region58: #{tpu_custom_call.1} parent=55 // pred_check_branch
          %768 = sbr.rel (%p766) target = $region60
        $region59: #{tpu_custom_call.1} parent=55 // pred_region
          %s770 = ssub.s32 64, 64
          %771 = vsyncadd %s762, %s770
          %s772 = smul.addr %s23, 64
          %s773 = scalar_lea.hbm %s9, %s772
          %s775 = sshll.u32 %s765, 4
          %s776 = int_to_ptr.vmem [resolvable:$true] %s775
          %778 = dma.vmem_to_hbm [thread:$0]  %s776, 64, %s773, %s762
        $region60: #{tpu_custom_call.1} parent=55 // pred_fallthru
          _
      $region56: #{tpu_custom_call.1} parent=5 // pred_fallthru
        _
      %p779 = scmp.le.s32.totalorder 2, %s18
      // Predicated region
      $region61: #{tpu_custom_call.1} parent=5 // pred_check
        %p780 = pneg %p779
      $region62: #{tpu_custom_call.1} parent=5 // pred_check_branch
        %782 = sbr.rel (%p780) target = $region64
      $region63: #{tpu_custom_call.1} parent=5 // pred_region
        %s783 = ssub.s32 %s18, 2
        // Predicated region
        $region65: #{tpu_custom_call.1} parent=63 // pred_check
          %p784 = pneg %p241
        $region66: #{tpu_custom_call.1} parent=63 // pred_check_branch
          %786 = sbr.rel (%p784) target = $region68
        $region67: #{tpu_custom_call.1} parent=63 // pred_region
          %s787 = sand.u32 %s226, 1
          %s788 = scalar_lea.sflag [#allocation3], %s787
          %s789 = sand.u32 %s226, 1
          %s790 = smul.addr %s789, 4
          %s791 = scalar_lea.vmem [#allocation2], %s790
          %792 = dma.done %s788, 64
        $region68: #{tpu_custom_call.1} parent=63 // pred_fallthru
          _
      $region64: #{tpu_custom_call.1} parent=5 // pred_fallthru
        _
    $region6: #{tpu_custom_call.1} parent=1 // loop_footer
      %s22 = sadd.s32 1, %s18
    $region7: #{tpu_custom_call.1} parent=1 // loop_footer_branch
      %17 = sbr.rel target = $region3
    $region8: #{tpu_custom_call.1} parent=1 // loop_exit
      _
    %793 = vsyncpa [#allocation3], 1
    %s794 = scalar_lea.sflag [#allocation3], 1
    %795 = vsyncpa %s794, 1

</llo_original>
